<compile_context>
chip_gen: v6e
topology: v6e:2x2x1
jax: 0.10.0
libtpu: 0.0.40
codegen_flags: <defaults>
</compile_context>

<pallas_src>
import functools

import jax
import jax.numpy as jnp
from jax.experimental import pallas as pl
from jax.experimental.pallas import tpu as pltpu


_LANES = 128        # vreg lane width; 128 % 4 == 0 -> lane & 3 == quat channel
_TILE_ROWS = 2048   # rows of 128 lanes per grid step (1 MiB f32 per buffer)


# ----------------------------------------------------------------------------
# Kernel: lane-dense streaming sum of (v - identity_quat)^2, scalar mean out
# ----------------------------------------------------------------------------
def _c1_smooth_loss_kernel(x_ref, out_ref, acc_ref, *, n_valid, padded_n,
                           tile_rows, inv_n):
    step = pl.program_id(0)

    @pl.when(step == 0)
    def _():
        acc_ref[...] = jnp.zeros_like(acc_ref)

    # Cast on load; input arrives in its native dtype (no wrapper-side copy).
    x = x_ref[...].astype(jnp.float32)                     # (tile_rows, 128)

    # Identity-quaternion target, lane-dense: flattened element i belongs to
    # quaternion channel i & 3, and 128 % 4 == 0 makes that a pure lane mask.
    lane = jax.lax.broadcasted_iota(jnp.int32, x.shape, 1)
    tgt = (lane & 3) == 3
    if padded_n != n_valid:
        # Zero-padded tail: fold validity into the target mask so padded
        # elements (value 0, target forced to 0) contribute 0 to the sum.
        row = jax.lax.broadcasted_iota(jnp.int32, x.shape, 0)
        flat_idx = (step * tile_rows + row) * _LANES + lane
        tgt = jnp.logical_and(tgt, flat_idx < n_valid)

    diff = x - tgt.astype(jnp.float32)                     # no 2-const select
    acc_ref[...] += jnp.sum(diff * diff, keepdims=True)    # (1, 1) partial

    @pl.when(step == pl.num_programs(0) - 1)
    def _():
        out_ref[...] = acc_ref[...] * inv_n                # mean over B*4


# ----------------------------------------------------------------------------
# Wrapper
# ----------------------------------------------------------------------------
def c1_smooth_loss_pallas(v_r_axis, v_axis_t_1=None, real_postion=None):
    """MSE(v_r_axis, identity-quaternion target).  Extra args are unused,
    matching the reference forward signature."""
    del v_axis_t_1, real_postion  # unused by the reference forward
    assert v_r_axis.ndim == 2 and v_r_axis.shape[1] == 4, \
        "expected (batch, 4) quaternion axis input"
    b, c = v_r_axis.shape
    n = b * c  # un-padded element count (divisor of the mean)

    rows = max(pl.cdiv(n, _LANES), 1)
    if rows <= _TILE_ROWS:
        num_tiles, tile_rows = 1, rows            # single full-array block
    else:
        num_tiles, tile_rows = pl.cdiv(rows, _TILE_ROWS), _TILE_ROWS
    padded_rows = num_tiles * tile_rows
    padded_n = padded_rows * _LANES

    # Lane-dense view: (B, 4) -> (padded_rows, 128), zero-padding the tail
    # (the kernel masks the padding so it contributes nothing).  Native dtype
    # throughout — no f32 materialization before the kernel.
    flat = v_r_axis.reshape(-1)
    if padded_n != n:
        flat = jnp.pad(flat, (0, padded_n - n))
    x2d = flat.reshape(padded_rows, _LANES)

    kernel = functools.partial(
        _c1_smooth_loss_kernel,
        n_valid=n, padded_n=padded_n, tile_rows=tile_rows,
        inv_n=float(1.0 / n))

    out = pl.pallas_call(
        kernel,
        out_shape=jax.ShapeDtypeStruct((1, 1), jnp.float32),
        grid_spec=pltpu.PrefetchScalarGridSpec(
            num_scalar_prefetch=0,
            grid=(num_tiles,),
            in_specs=[pl.BlockSpec((tile_rows, _LANES), lambda i: (i, 0))],
            out_specs=pl.BlockSpec((1, 1), lambda i: (0, 0)),
            scratch_shapes=[pltpu.VMEM((1, 1), jnp.float32)]),
        compiler_params=pltpu.CompilerParams(
            # Streaming reduction with a shared accumulator -> "arbitrary".
            # (A v7x dual-TC split would need per-core partials; not worth it
            # for this memory-bound 5-op loss.)
            dimension_semantics=("arbitrary",)),
    )(x2d)
    return out[0, 0]


# ----------------------------------------------------------------------------
# Demo / correctness check
# ----------------------------------------------------------------------------
def _reference(v):
    target = jnp.zeros(v.shape, jnp.float32).at[:, 3].set(1.0)
    return jnp.mean((v.astype(jnp.float32) - target) ** 2)


if __name__ == "__main__":
    key = jax.random.PRNGKey(0)

    # 1) Small quaternion-sized input (the realistic case).
    b, c = 2, 4
    v_small = jax.random.normal(key, (b, c), jnp.float32)
    loss_small = jax.block_until_ready(c1_smooth_loss_pallas(v_small))
    ref_small = _reference(v_small)
    assert loss_small.shape == ()
    assert bool(jnp.isfinite(loss_small))
    assert bool(jnp.allclose(loss_small, ref_small, rtol=1e-6, atol=1e-6))

    # 2) Larger batch to exercise the multi-tile grid + padding-mask path.
    b2 = 70_000
    v_big = jax.random.normal(jax.random.PRNGKey(1), (b2, 4), jnp.float32)
    loss_big = jax.block_until_ready(c1_smooth_loss_pallas(v_big))
    ref_big = _reference(v_big)
    assert bool(jnp.isfinite(loss_big))
    assert bool(jnp.allclose(loss_big, ref_big, rtol=1e-4, atol=1e-6))

    print("KERNEL_OK")
</pallas_src>

<mosaic_0001>
module attributes {stable_mosaic.version = 11 : i64} {
  func.func @_c1_smooth_loss_kernel(%arg0: i32, %arg1: memref<1x128xf32, #tpu.memory_space<vmem>>, %arg2: memref<1x1xf32, #tpu.memory_space<vmem>>, %arg3: memref<1x1xf32, #tpu.memory_space<vmem>>) attributes {dimension_semantics = [#tpu.dimension_semantics<arbitrary>], iteration_bounds = array<i64: 1>, scalar_prefetch = 0 : i64, scratch_operands = 1 : i64, tpu.core_type = #tpu.core_type<tc>, window_params = [{transform_indices = @transform_0, window_bounds = array<i64: 1, 128>}, {pipeline_mode = #tpu.pipeline_mode<synchronous>, transform_indices = @transform_1, window_bounds = array<i64: 1, 1>}]} {
    %c0_i32 = arith.constant 0 : i32
    %0 = arith.cmpi eq, %arg0, %c0_i32 : i32
    %1 = arith.extui %0 : i1 to i32
    %c0_i32_0 = arith.constant 0 : i32
    %2 = arith.cmpi ne, %1, %c0_i32_0 : i32
    scf.if %2 {
      %cst_9 = arith.constant 0.000000e+00 : f32
      %34 = vector.broadcast %cst_9 : f32 to vector<1x1xf32>
      %c0_10 = arith.constant 0 : index
      %c0_11 = arith.constant 0 : index
      %35 = vector.load %arg3[%c0_10, %c0_11] : memref<1x1xf32, #tpu.memory_space<vmem>>, vector<1x1xf32>
      tpu.vector_store %arg3[%c0_10, %c0_11], %34 {strides = array<i32>} : memref<1x1xf32, #tpu.memory_space<vmem>>, vector<1x1xf32>,
    } else {
    }
    %c0 = arith.constant 0 : index
    %c0_1 = arith.constant 0 : index
    %3 = vector.load %arg1[%c0, %c0_1] : memref<1x128xf32, #tpu.memory_space<vmem>>, vector<1x128xf32>
    %4 = tpu.iota {dimensions = array<i32: 1>} : vector<1x128xi32>
    %c3_i32 = arith.constant 3 : i32
    %5 = vector.broadcast %c3_i32 : i32 to vector<1x128xi32>
    %6 = arith.andi %4, %5 : vector<1x128xi32>
    %c3_i32_2 = arith.constant 3 : i32
    %7 = vector.broadcast %c3_i32_2 : i32 to vector<1x128xi32>
    %8 = arith.cmpi eq, %6, %7 : vector<1x128xi32>
    %9 = tpu.iota {dimensions = array<i32: 0>} : vector<1x128xi32>
    %c1_i32 = arith.constant 1 : i32
    %10 = arith.muli %arg0, %c1_i32 : i32
    %11 = vector.broadcast %10 : i32 to vector<1x128xi32>
    %12 = arith.addi %11, %9 : vector<1x128xi32>
    %c128_i32 = arith.constant 128 : i32
    %13 = vector.broadcast %c128_i32 : i32 to vector<1x128xi32>
    %14 = arith.muli %12, %13 : vector<1x128xi32>
    %15 = arith.addi %14, %4 : vector<1x128xi32>
    %c8_i32 = arith.constant 8 : i32
    %16 = vector.broadcast %c8_i32 : i32 to vector<1x128xi32>
    %17 = arith.cmpi slt, %15, %16 : vector<1x128xi32>
    %18 = arith.andi %8, %17 : vector<1x128xi1>
    %19 = arith.extui %18 : vector<1x128xi1> to vector<1x128xi32>
    %20 = arith.sitofp %19 : vector<1x128xi32> to vector<1x128xf32>
    %21 = arith.subf %3, %20 : vector<1x128xf32>
    %c0_3 = arith.constant 0 : index
    %c0_4 = arith.constant 0 : index
    %22 = vector.load %arg3[%c0_3, %c0_4] : memref<1x1xf32, #tpu.memory_space<vmem>>, vector<1x1xf32>
    %23 = arith.mulf %21, %21 : vector<1x128xf32>
    %24 = vector.shape_cast %23 : vector<1x128xf32> to vector<1x1x128xf32>
    %cst = arith.constant dense<0.000000e+00> : vector<1xf32>
    %25 = vector.multi_reduction <add>, %24, %cst [1, 2] : vector<1x1x128xf32> to vector<1xf32>
    %26 = vector.shape_cast %25 : vector<1xf32> to vector<1x1x1xf32>
    %27 = vector.extract %26[0, 0, 0] : f32 from vector<1x1x1xf32>
    %28 = vector.broadcast %27 : f32 to vector<1x1xf32>
    %29 = arith.addf %22, %28 : vector<1x1xf32>
    %c0_5 = arith.constant 0 : index
    %c0_6 = arith.constant 0 : index
    %30 = vector.load %arg3[%c0_5, %c0_6] : memref<1x1xf32, #tpu.memory_space<vmem>>, vector<1x1xf32>
    tpu.vector_store %arg3[%c0_5, %c0_6], %29 {strides = array<i32>} : memref<1x1xf32, #tpu.memory_space<vmem>>, vector<1x1xf32>,
    %c0_i32_7 = arith.constant 0 : i32
    %31 = arith.cmpi eq, %arg0, %c0_i32_7 : i32
    %32 = arith.extui %31 : i1 to i32
    %c0_i32_8 = arith.constant 0 : i32
    %33 = arith.cmpi ne, %32, %c0_i32_8 : i32
    scf.if %33 {
      %c0_9 = arith.constant 0 : index
      %c0_10 = arith.constant 0 : index
      %34 = vector.load %arg3[%c0_9, %c0_10] : memref<1x1xf32, #tpu.memory_space<vmem>>, vector<1x1xf32>
      %cst_11 = arith.constant 1.250000e-01 : f32
      %35 = vector.broadcast %cst_11 : f32 to vector<1x1xf32>
      %36 = arith.mulf %34, %35 : vector<1x1xf32>
      %c0_12 = arith.constant 0 : index
      %c0_13 = arith.constant 0 : index
      %37 = vector.load %arg2[%c0_12, %c0_13] : memref<1x1xf32, #tpu.memory_space<vmem>>, vector<1x1xf32>
      tpu.vector_store %arg2[%c0_12, %c0_13], %36 {strides = array<i32>} : memref<1x1xf32, #tpu.memory_space<vmem>>, vector<1x1xf32>,
    } else {
    }
    return
  }
  func.func @transform_0(%arg0: i32) -> (i32, i32) {
    %c0_i32 = arith.constant 0 : i32
    %c0_i32_0 = arith.constant 0 : i32
    return %arg0, %c0_i32 : i32, i32
  }
  func.func @transform_1(%arg0: i32) -> (i32, i32) {
    %c0_i32 = arith.constant 0 : i32
    %c0_i32_0 = arith.constant 0 : i32
    %c0_i32_1 = arith.constant 0 : i32
    return %c0_i32, %c0_i32_0 : i32, i32
  }
}

</mosaic_0001>

<llo_original>
// kernel: tpu_custom_call.1
$region0: #{tpu_custom_call.1}
  #allocation0 [shape = 'u32[]', space=smem, size = 0x4, offset = 0x4, fixed_abs, tag = 'smem constant byte address 0x4 - core index']
  #allocation1 [shape = 'u32[144,128]{1,0:T(1,128)}', space=vmem, size = 0x12000, scoped, tag = 'internal scratch']
  #allocation2 [shape = 'f32[1,1]{1,0:T(1,128)}', space=vmem, size = 0x200, scoped, tag = 'scratch operand']
  %s0 = inlined_call_operand.hbm [shape: f32[1,128], index: 0, kind: input, shape index: {}]
  %s1 = inlined_call_operand.hbm [shape: f32[1,1], index: 1, kind: output, shape index: {}]
  %s2 = sld [smem:[#allocation0]]
  $region26: #{tpu_custom_call.1} parent=0
    _
  %s4 = ssub.s32 1, %s2
  %s5 = scalar_select 0, %s4, %s2
  $region1: #{tpu_custom_call.1} parent=0
    #allocation3 [shape = 'u8[512]{0}', space=vmem, size = 0x400, scoped, tag = 'input window, operand 0, single buffered']
    #allocation4 [shape = 's32[1]{0}', space=sflag, size = 0x4, scoped, tag = 'scoped memory for tpu_custom_call.1']
    #allocation5 [shape = 's32[1]{0}', space=sflag, size = 0x4, scoped, tag = 'scoped memory for tpu_custom_call.1']
    #allocation6 [shape = 'u8[512]{0}', space=vmem, size = 0x400, scoped, tag = 'output window, operand 0, single buffered']
    %6 = vsyncpa [#allocation4], 0
    %7 = vsyncpa [#allocation5], 0
    // Predicated region
    $region2: #{tpu_custom_call.1} parent=1 // pred_check
      _
    $region3: #{tpu_custom_call.1} parent=1 // pred_check_branch
      %9 = sbr.rel (0) target = $region5
    $region4: #{tpu_custom_call.1} parent=1 // pred_region
      %s11 = ssub.s32 16, 16
      %12 = vsyncadd [#allocation4], %s11
      %s14 = sshll.u32 [#allocation3], 4
      %s15 = int_to_ptr.vmem [resolvable:$true] %s14
      %17 = dma.hbm_to_vmem [thread:$0]  %s0, 16, %s15, [#allocation4]
    $region5: #{tpu_custom_call.1} parent=1 // pred_fallthru
      _
    // Predicated region
    $region6: #{tpu_custom_call.1} parent=1 // pred_check
      _
    $region7: #{tpu_custom_call.1} parent=1 // pred_check_branch
      %19 = sbr.rel (0) target = $region9
    $region8: #{tpu_custom_call.1} parent=1 // pred_region
      %20 = dma.done [#allocation4], 16
    $region9: #{tpu_custom_call.1} parent=1 // pred_fallthru
      _
    %p21 = scmp.eq.s32.totalorder 0, 0
    // Predicated region
    $region10: #{tpu_custom_call.1} parent=1 // pred_check
      %p22 = pneg %p21
    $region11: #{tpu_custom_call.1} parent=1 // pred_check_branch
      %24 = sbr.rel (%p22) target = $region13
    $region12: #{tpu_custom_call.1} parent=1 // pred_region
      %vm25 = vcmask 0
      %26 = vst.msk [vmem:[#allocation2] sm:$0x1] %vm25, 0.0
    $region13: #{tpu_custom_call.1} parent=1 // pred_fallthru
      _
    %v27 = vld [vmem:[#allocation3] sm:$0x1]
    %v28 = vlaneseq
    %v29 = vand.u32 %v28, 127
    %v30 = vand.u32 %v29, 3
    %vm31 = vcmp.eq.s32.totalorder %v30, 3
    %v32 = vlaneseq
    %v33 = vshrl.u32 %v32, 7
    %v34 = vstv 0
    %v35 = vadd.s32 %v34, %v33
    %v36 = vmul.u32 %v35, 128
    %v37 = vadd.s32 %v36, %v29
    %vm38 = vcmp.lt.s32.totalorder %v37, 8
    %vm39 = vmand %vm31, %vm38
    %v40 = vsel %vm39, 1, 0
    %v41 = vcvt.s32.f32 %v40
    %v42 = vsub.f32 %v27, %v41
    %v43 = vld [vmem:[#allocation2] sm:$0x1]
    %v44 = vmul.f32 %v42, %v42
    %vm45 = vcmask 1040384
    %v46 = vsel %vm45, %v44, 0.0
    %47 = vadd.xlane.f32.xlu0 %v46
    %v48 = vpop.xlane.xlu0 %47
    %v49 = vrot.slane %v48, 4
    %v50 = vadd.f32 %v48, %v49
    %v51 = vrot.slane %v50, 2
    %v52 = vadd.f32 %v50, %v51
    %v53 = vrot.slane %v52, 1
    %v54 = vadd.f32 %v52, %v53
    %s55 = vtos %v54
    %v56 = vstv %s55
    %v57 = vadd.f32 %v43, %v56
    %vm58 = vcmask 0
    %59 = vst.msk [vmem:[#allocation2] sm:$0x1] %vm58, %v57
    // Predicated region
    $region14: #{tpu_custom_call.1} parent=1 // pred_check
      %p60 = pneg %p21
    $region15: #{tpu_custom_call.1} parent=1 // pred_check_branch
      %62 = sbr.rel (%p60) target = $region17
    $region16: #{tpu_custom_call.1} parent=1 // pred_region
      %v63 = vld [vmem:[#allocation2] sm:$0x1]
      %v64 = vmul.f32 %v63, 0.125
      %65 = vst.msk [vmem:[#allocation6] sm:$0x1] %vm58, %v64
    $region17: #{tpu_custom_call.1} parent=1 // pred_fallthru
      _
    // Predicated region
    $region18: #{tpu_custom_call.1} parent=1 // pred_check
      _
    $region19: #{tpu_custom_call.1} parent=1 // pred_check_branch
      %67 = sbr.rel (0) target = $region21
    $region20: #{tpu_custom_call.1} parent=1 // pred_region
      %s69 = ssub.s32 16, 16
      %70 = vsyncadd [#allocation5], %s69
      %s72 = sshll.u32 [#allocation6], 4
      %s73 = int_to_ptr.vmem [resolvable:$true] %s72
      %75 = dma.vmem_to_hbm [thread:$0]  %s73, 16, %s1, [#allocation5]
    $region21: #{tpu_custom_call.1} parent=1 // pred_fallthru
      _
    // Predicated region
    $region22: #{tpu_custom_call.1} parent=1 // pred_check
      _
    $region23: #{tpu_custom_call.1} parent=1 // pred_check_branch
      %77 = sbr.rel (0) target = $region25
    $region24: #{tpu_custom_call.1} parent=1 // pred_region
      %78 = dma.done [#allocation5], 16
    $region25: #{tpu_custom_call.1} parent=1 // pred_fallthru
      _
    %79 = vsyncpa [#allocation4], 1
    %80 = vsyncpa [#allocation5], 1

</llo_original>
